<compile_context>
chip_gen: v6e
topology: v6e:2x2x1
jax: 0.10.0
libtpu: 0.0.40
codegen_flags: <defaults>
</compile_context>

<pallas_src>
import jax
import jax.numpy as jnp
from jax.experimental import pallas as pl
from jax.experimental.pallas import tpu as pltpu


def _round_up(x, m):
    return (x + m - 1) // m * m


def _cdiv(a, b):
    return (a + b - 1) // b


def _pick_tiling(batch, tile_b_max):
    """Batch-derived tiling: bounded padding waste, >=2 steps when possible."""
    b128 = _round_up(batch, 128)
    min_steps = 2 if b128 >= 256 else 1          # let v7x shard across 2 TCs
    n_steps = max(_cdiv(batch, tile_b_max), min_steps)
    tile_b = _round_up(_cdiv(batch, n_steps), 128)
    n_steps = _cdiv(b128, tile_b)                # drop empty steps
    return tile_b, n_steps * tile_b


# ----------------------------------------------------------------------------
# Kernel: one batch tile of the whole NeuMF hot path, feature-major.
# ----------------------------------------------------------------------------
def neumf_kernel(
    ue_ref, ie_ref,                 # (2F, TB) bf16 each: rows [0:F]=MLP, [F:2F]=GMF
    w1u_ref, w1i_ref, b1_ref,       # (32, F), (32, F), (32, 1)
    w2_ref, b2_ref,                 # (16, 32), (16, 1)
    w3_ref, b3_ref,                 # (8, 16),  (8, 1)
    wom_ref, wog_ref, bo_ref,       # (1, F), (1, F), (1, 1)
    out_ref,                        # (1, TB)
):
    f = w1u_ref.shape[1]
    ue = ue_ref[...].astype(jnp.float32)          # (2F, TB)
    ie = ie_ref[...].astype(jnp.float32)          # (2F, TB)

    # MLP tower.  torch.cat([u_mlp, i_mlp], dim=1) is folded into the split
    # layer-1 weight (w1 = [w1_user | w1_item]) -> no activation concat.
    h = (
        jnp.dot(w1u_ref[...], ue[:f], preferred_element_type=jnp.float32)
        + jnp.dot(w1i_ref[...], ie[:f], preferred_element_type=jnp.float32)
        + b1_ref[...]
    )
    h = jnp.maximum(h, 0.0)                       # (32, TB)
    h = jnp.maximum(
        jnp.dot(w2_ref[...], h, preferred_element_type=jnp.float32) + b2_ref[...], 0.0
    )                                             # (16, TB)
    h = jnp.maximum(
        jnp.dot(w3_ref[...], h, preferred_element_type=jnp.float32) + b3_ref[...], 0.0
    )                                             # (F, TB)

    # GMF branch: elementwise product of embeddings (VPU, f32).
    gmf = ue[f:] * ie[f:]                         # (F, TB)

    # Final Linear(2F, 1) on cat([mlp, gmf]) with the concat folded into a
    # split output weight -> no (2F, TB) feats tensor materialized.
    out_ref[...] = (
        jnp.dot(wom_ref[...], h, preferred_element_type=jnp.float32)
        + jnp.dot(wog_ref[...], gmf, preferred_element_type=jnp.float32)
        + bo_ref[...]
    )


# ----------------------------------------------------------------------------
# Wrapper: stacked bf16 feature-major gathers + tiled, pipelined pallas_call.
# ----------------------------------------------------------------------------
def neumf_forward(params, user_indices, item_indices, *, tile_b_max=32768):
    two_f = params["user_tab"].shape[0]
    f = two_f // 2
    B = user_indices.shape[0]

    tile_b, b_pad = _pick_tiling(B, tile_b_max)
    pad = b_pad - B
    u_idx = jnp.pad(user_indices, (0, pad))
    i_idx = jnp.pad(item_indices, (0, pad))

    # One bf16 feature-major gather per catalog -> (2F, b_pad); batch lands
    # directly on the lane axis inside the kernel.
    ue = jnp.take(params["user_tab"], u_idx, axis=1)
    ie = jnp.take(params["item_tab"], i_idx, axis=1)

    # Fold the two torch.cat ops into split weights (tiny XLA slices).
    w1u, w1i = params["w1"][:, :f], params["w1"][:, f:]
    wom, wog = params["wo"][:, :f], params["wo"][:, f:]

    emb_spec = pl.BlockSpec((two_f, tile_b), lambda i: (0, i))

    def const(x):  # weights/biases stay VMEM-resident across grid steps
        return pl.BlockSpec(x.shape, lambda i: (0, 0))

    grid_spec = pltpu.PrefetchScalarGridSpec(
        num_scalar_prefetch=0,
        grid=(b_pad // tile_b,),
        in_specs=[
            emb_spec, emb_spec,
            const(w1u), const(w1i), const(params["b1"]),
            const(params["w2"]), const(params["b2"]),
            const(params["w3"]), const(params["b3"]),
            const(wom), const(wog), const(params["bo"]),
        ],
        out_specs=pl.BlockSpec((1, tile_b), lambda i: (0, i)),
    )

    # Advisory cost: ~2.3k flops/row; bf16 inputs + f32 output per row.
    flops = int(b_pad) * 2 * (32 * 2 * f + 16 * 32 + f * 16 + 2 * f + f)
    bytes_accessed = int(b_pad) * (2 * two_f * 2 + 4)
    cost = pl.CostEstimate(flops=flops, transcendentals=0,
                           bytes_accessed=bytes_accessed)

    out = pl.pallas_call(
        neumf_kernel,
        out_shape=jax.ShapeDtypeStruct((1, b_pad), jnp.float32),
        grid_spec=grid_spec,
        compiler_params=pltpu.CompilerParams(
            dimension_semantics=("parallel",),
            vmem_limit_bytes=48 * 1024 * 1024,
        ),
        cost_estimate=cost,
    )(
        ue, ie,
        w1u, w1i, params["b1"],
        params["w2"], params["b2"],
        params["w3"], params["b3"],
        wom, wog, params["bo"],
    )
    # Back to the PyTorch-style (B, 1) logits.
    return out[0, :B].reshape(B, 1)


# ----------------------------------------------------------------------------
# Pure-JAX reference mirroring the PyTorch forward (same bf16-stored params,
# f32 compute, so it matches the kernel numerics).
# ----------------------------------------------------------------------------
def neumf_reference(params, user_indices, item_indices):
    f = params["user_tab"].shape[0] // 2
    u = params["user_tab"][:, user_indices].astype(jnp.float32)   # (2F, B)
    i = params["item_tab"][:, item_indices].astype(jnp.float32)   # (2F, B)

    x = jnp.concatenate([u[:f], i[:f]], axis=0).T                 # (B, 2F)
    h = jnp.maximum(x @ params["w1"].T + params["b1"].T, 0.0)
    h = jnp.maximum(h @ params["w2"].T + params["b2"].T, 0.0)
    h = jnp.maximum(h @ params["w3"].T + params["b3"].T, 0.0)

    gmf = (u[f:] * i[f:]).T                                       # (B, F)
    feats = jnp.concatenate([h, gmf], axis=1)                     # (B, 2F)
    return feats @ params["wo"].T + params["bo"].T                # (B, 1)


def init_params(key, n_users, n_items, n_features):
    """Deterministic synthetic params. Embedding tables are stacked
    feature-major bf16 (rows [0:F]=MLP, [F:2F]=GMF); Linear weights (out, in),
    biases (out, 1), f32."""
    ks = jax.random.split(key, 10)
    f = n_features

    def nrm(k, shape, scale, dtype=jnp.float32):
        return (scale * jax.random.normal(k, shape)).astype(dtype)

    # MLP widths: [32 // 2**i for i in range(6) if 32 // 2**i >= n_features]
    # with n_features = 8 -> [32, 16, 8]
    return {
        "user_tab": nrm(ks[0], (2 * f, n_users), 0.01, jnp.bfloat16),
        "item_tab": nrm(ks[1], (2 * f, n_items), 0.01, jnp.bfloat16),
        "w1": nrm(ks[2], (32, 2 * f), 0.1),   # Linear(2F, 32)
        "b1": nrm(ks[3], (32, 1), 0.1),
        "w2": nrm(ks[4], (16, 32), 0.1),      # Linear(32, 16)
        "b2": nrm(ks[5], (16, 1), 0.1),
        "w3": nrm(ks[6], (8, 16), 0.1),       # Linear(16, 8)
        "b3": nrm(ks[7], (8, 1), 0.1),
        "wo": nrm(ks[8], (1, 2 * f), 0.1),    # Linear(2F, 1)
        "bo": nrm(ks[9], (1, 1), 0.1),
    }


if __name__ == "__main__":
    n_users, n_items, n_features = 10, 12, 8
    batch = 4

    key = jax.random.PRNGKey(0)
    pkey, ukey, ikey = jax.random.split(key, 3)
    params = init_params(pkey, n_users, n_items, n_features)

    user_indices = jax.random.randint(ukey, (batch,), 0, n_users, dtype=jnp.int32)
    item_indices = jax.random.randint(ikey, (batch,), 0, n_items, dtype=jnp.int32)

    logits = neumf_forward(params, user_indices, item_indices)
    logits = jax.block_until_ready(logits)

    ref = neumf_reference(params, user_indices, item_indices)
    assert logits.shape == (batch, 1), logits.shape
    assert jnp.allclose(logits, ref, atol=1e-5, rtol=1e-4), (logits, ref)

    print("KERNEL_OK")
</pallas_src>

<mosaic_0001>
module attributes {stable_mosaic.version = 11 : i64} {
  func.func @neumf_kernel(%arg0: i32, %arg1: memref<16x128xbf16, #tpu.memory_space<vmem>>, %arg2: memref<16x128xbf16, #tpu.memory_space<vmem>>, %arg3: memref<32x8xf32, #tpu.memory_space<vmem>>, %arg4: memref<32x8xf32, #tpu.memory_space<vmem>>, %arg5: memref<32x1xf32, #tpu.memory_space<vmem>>, %arg6: memref<16x32xf32, #tpu.memory_space<vmem>>, %arg7: memref<16x1xf32, #tpu.memory_space<vmem>>, %arg8: memref<8x16xf32, #tpu.memory_space<vmem>>, %arg9: memref<8x1xf32, #tpu.memory_space<vmem>>, %arg10: memref<1x8xf32, #tpu.memory_space<vmem>>, %arg11: memref<1x8xf32, #tpu.memory_space<vmem>>, %arg12: memref<1x1xf32, #tpu.memory_space<vmem>>, %arg13: memref<1x128xf32, #tpu.memory_space<vmem>>) attributes {dimension_semantics = [#tpu.dimension_semantics<parallel>], iteration_bounds = array<i64: 1>, scalar_prefetch = 0 : i64, scratch_operands = 0 : i64, tpu.core_type = #tpu.core_type<tc>, window_params = [{transform_indices = @transform_0, window_bounds = array<i64: 16, 128>}, {transform_indices = @transform_1, window_bounds = array<i64: 16, 128>}, {pipeline_mode = #tpu.pipeline_mode<synchronous>, transform_indices = @transform_2, window_bounds = array<i64: 32, 8>}, {pipeline_mode = #tpu.pipeline_mode<synchronous>, transform_indices = @transform_3, window_bounds = array<i64: 32, 8>}, {pipeline_mode = #tpu.pipeline_mode<synchronous>, transform_indices = @transform_4, window_bounds = array<i64: 32, 1>}, {pipeline_mode = #tpu.pipeline_mode<synchronous>, transform_indices = @transform_5, window_bounds = array<i64: 16, 32>}, {pipeline_mode = #tpu.pipeline_mode<synchronous>, transform_indices = @transform_6, window_bounds = array<i64: 16, 1>}, {pipeline_mode = #tpu.pipeline_mode<synchronous>, transform_indices = @transform_7, window_bounds = array<i64: 8, 16>}, {pipeline_mode = #tpu.pipeline_mode<synchronous>, transform_indices = @transform_8, window_bounds = array<i64: 8, 1>}, {pipeline_mode = #tpu.pipeline_mode<synchronous>, transform_indices = @transform_9, window_bounds = array<i64: 1, 8>}, {pipeline_mode = #tpu.pipeline_mode<synchronous>, transform_indices = @transform_10, window_bounds = array<i64: 1, 8>}, {pipeline_mode = #tpu.pipeline_mode<synchronous>, transform_indices = @transform_11, window_bounds = array<i64: 1, 1>}, {transform_indices = @transform_12, window_bounds = array<i64: 1, 128>}]} {
    %c0 = arith.constant 0 : index
    %c0_0 = arith.constant 0 : index
    %0 = vector.load %arg1[%c0, %c0_0] : memref<16x128xbf16, #tpu.memory_space<vmem>>, vector<16x128xbf16>
    %1 = arith.extf %0 : vector<16x128xbf16> to vector<16x128xf32>
    %c0_1 = arith.constant 0 : index
    %c0_2 = arith.constant 0 : index
    %2 = vector.load %arg2[%c0_1, %c0_2] : memref<16x128xbf16, #tpu.memory_space<vmem>>, vector<16x128xbf16>
    %3 = arith.extf %2 : vector<16x128xbf16> to vector<16x128xf32>
    %c0_3 = arith.constant 0 : index
    %c0_4 = arith.constant 0 : index
    %4 = vector.load %arg3[%c0_3, %c0_4] : memref<32x8xf32, #tpu.memory_space<vmem>>, vector<32x8xf32>
    %5 = vector.extract_strided_slice %1 {offsets = [0, 0], sizes = [8, 128], strides = [1, 1]} : vector<16x128xf32> to vector<8x128xf32>
    %cst = arith.constant dense<0.000000e+00> : vector<32x128xf32>
    %6 = tpu.matmul %4, %5, %cst {dimension_numbers = #tpu.dot_dimension_numbers<[1], [0], [0], [1], [0, 0, 1, 1], [], []>} : vector<32x8xf32>, vector<8x128xf32>, vector<32x128xf32> -> vector<32x128xf32>
    %c0_5 = arith.constant 0 : index
    %c0_6 = arith.constant 0 : index
    %7 = vector.load %arg4[%c0_5, %c0_6] : memref<32x8xf32, #tpu.memory_space<vmem>>, vector<32x8xf32>
    %8 = vector.extract_strided_slice %3 {offsets = [0, 0], sizes = [8, 128], strides = [1, 1]} : vector<16x128xf32> to vector<8x128xf32>
    %cst_7 = arith.constant dense<0.000000e+00> : vector<32x128xf32>
    %9 = tpu.matmul %7, %8, %cst_7 {dimension_numbers = #tpu.dot_dimension_numbers<[1], [0], [0], [1], [0, 0, 1, 1], [], []>} : vector<32x8xf32>, vector<8x128xf32>, vector<32x128xf32> -> vector<32x128xf32>
    %10 = arith.addf %6, %9 : vector<32x128xf32>
    %c0_8 = arith.constant 0 : index
    %c0_9 = arith.constant 0 : index
    %11 = vector.load %arg5[%c0_8, %c0_9] : memref<32x1xf32, #tpu.memory_space<vmem>>, vector<32x1xf32>
    %12 = vector.broadcast %11 : vector<32x1xf32> to vector<32x128xf32>
    %13 = arith.addf %10, %12 : vector<32x128xf32>
    %cst_10 = arith.constant 0.000000e+00 : f32
    %14 = vector.broadcast %cst_10 : f32 to vector<32x128xf32>
    %15 = arith.maximumf %13, %14 : vector<32x128xf32>
    %c0_11 = arith.constant 0 : index
    %c0_12 = arith.constant 0 : index
    %16 = vector.load %arg6[%c0_11, %c0_12] : memref<16x32xf32, #tpu.memory_space<vmem>>, vector<16x32xf32>
    %cst_13 = arith.constant dense<0.000000e+00> : vector<16x128xf32>
    %17 = tpu.matmul %16, %15, %cst_13 {dimension_numbers = #tpu.dot_dimension_numbers<[1], [0], [0], [1], [0, 0, 1, 1], [], []>} : vector<16x32xf32>, vector<32x128xf32>, vector<16x128xf32> -> vector<16x128xf32>
    %c0_14 = arith.constant 0 : index
    %c0_15 = arith.constant 0 : index
    %18 = vector.load %arg7[%c0_14, %c0_15] : memref<16x1xf32, #tpu.memory_space<vmem>>, vector<16x1xf32>
    %19 = vector.broadcast %18 : vector<16x1xf32> to vector<16x128xf32>
    %20 = arith.addf %17, %19 : vector<16x128xf32>
    %cst_16 = arith.constant 0.000000e+00 : f32
    %21 = vector.broadcast %cst_16 : f32 to vector<16x128xf32>
    %22 = arith.maximumf %20, %21 : vector<16x128xf32>
    %c0_17 = arith.constant 0 : index
    %c0_18 = arith.constant 0 : index
    %23 = vector.load %arg8[%c0_17, %c0_18] : memref<8x16xf32, #tpu.memory_space<vmem>>, vector<8x16xf32>
    %cst_19 = arith.constant dense<0.000000e+00> : vector<8x128xf32>
    %24 = tpu.matmul %23, %22, %cst_19 {dimension_numbers = #tpu.dot_dimension_numbers<[1], [0], [0], [1], [0, 0, 1, 1], [], []>} : vector<8x16xf32>, vector<16x128xf32>, vector<8x128xf32> -> vector<8x128xf32>
    %c0_20 = arith.constant 0 : index
    %c0_21 = arith.constant 0 : index
    %25 = vector.load %arg9[%c0_20, %c0_21] : memref<8x1xf32, #tpu.memory_space<vmem>>, vector<8x1xf32>
    %26 = vector.broadcast %25 : vector<8x1xf32> to vector<8x128xf32>
    %27 = arith.addf %24, %26 : vector<8x128xf32>
    %cst_22 = arith.constant 0.000000e+00 : f32
    %28 = vector.broadcast %cst_22 : f32 to vector<8x128xf32>
    %29 = arith.maximumf %27, %28 : vector<8x128xf32>
    %30 = vector.extract_strided_slice %1 {offsets = [8, 0], sizes = [8, 128], strides = [1, 1]} : vector<16x128xf32> to vector<8x128xf32>
    %31 = vector.extract_strided_slice %3 {offsets = [8, 0], sizes = [8, 128], strides = [1, 1]} : vector<16x128xf32> to vector<8x128xf32>
    %32 = arith.mulf %30, %31 : vector<8x128xf32>
    %c0_23 = arith.constant 0 : index
    %c0_24 = arith.constant 0 : index
    %33 = vector.load %arg10[%c0_23, %c0_24] : memref<1x8xf32, #tpu.memory_space<vmem>>, vector<1x8xf32>
    %cst_25 = arith.constant dense<0.000000e+00> : vector<1x128xf32>
    %34 = tpu.matmul %33, %29, %cst_25 {dimension_numbers = #tpu.dot_dimension_numbers<[1], [0], [0], [1], [0, 0, 1, 1], [], []>} : vector<1x8xf32>, vector<8x128xf32>, vector<1x128xf32> -> vector<1x128xf32>
    %c0_26 = arith.constant 0 : index
    %c0_27 = arith.constant 0 : index
    %35 = vector.load %arg11[%c0_26, %c0_27] : memref<1x8xf32, #tpu.memory_space<vmem>>, vector<1x8xf32>
    %cst_28 = arith.constant dense<0.000000e+00> : vector<1x128xf32>
    %36 = tpu.matmul %35, %32, %cst_28 {dimension_numbers = #tpu.dot_dimension_numbers<[1], [0], [0], [1], [0, 0, 1, 1], [], []>} : vector<1x8xf32>, vector<8x128xf32>, vector<1x128xf32> -> vector<1x128xf32>
    %37 = arith.addf %34, %36 : vector<1x128xf32>
    %c0_29 = arith.constant 0 : index
    %c0_30 = arith.constant 0 : index
    %38 = vector.load %arg12[%c0_29, %c0_30] : memref<1x1xf32, #tpu.memory_space<vmem>>, vector<1x1xf32>
    %39 = vector.broadcast %38 : vector<1x1xf32> to vector<1x128xf32>
    %40 = arith.addf %37, %39 : vector<1x128xf32>
    %c0_31 = arith.constant 0 : index
    %c0_32 = arith.constant 0 : index
    %41 = vector.load %arg13[%c0_31, %c0_32] : memref<1x128xf32, #tpu.memory_space<vmem>>, vector<1x128xf32>
    tpu.vector_store %arg13[%c0_31, %c0_32], %40 {strides = array<i32>} : memref<1x128xf32, #tpu.memory_space<vmem>>, vector<1x128xf32>,
    return
  }
  func.func @transform_0(%arg0: i32) -> (i32, i32) {
    %c0_i32 = arith.constant 0 : i32
    %c0_i32_0 = arith.constant 0 : i32
    return %c0_i32, %arg0 : i32, i32
  }
  func.func @transform_1(%arg0: i32) -> (i32, i32) {
    %c0_i32 = arith.constant 0 : i32
    %c0_i32_0 = arith.constant 0 : i32
    return %c0_i32, %arg0 : i32, i32
  }
  func.func @transform_2(%arg0: i32) -> (i32, i32) {
    %c0_i32 = arith.constant 0 : i32
    %c0_i32_0 = arith.constant 0 : i32
    %c0_i32_1 = arith.constant 0 : i32
    return %c0_i32, %c0_i32_0 : i32, i32
  }
  func.func @transform_3(%arg0: i32) -> (i32, i32) {
    %c0_i32 = arith.constant 0 : i32
    %c0_i32_0 = arith.constant 0 : i32
    %c0_i32_1 = arith.constant 0 : i32
    return %c0_i32, %c0_i32_0 : i32, i32
  }
  func.func @transform_4(%arg0: i32) -> (i32, i32) {
    %c0_i32 = arith.constant 0 : i32
    %c0_i32_0 = arith.constant 0 : i32
    %c0_i32_1 = arith.constant 0 : i32
    return %c0_i32, %c0_i32_0 : i32, i32
  }
  func.func @transform_5(%arg0: i32) -> (i32, i32) {
    %c0_i32 = arith.constant 0 : i32
    %c0_i32_0 = arith.constant 0 : i32
    %c0_i32_1 = arith.constant 0 : i32
    return %c0_i32, %c0_i32_0 : i32, i32
  }
  func.func @transform_6(%arg0: i32) -> (i32, i32) {
    %c0_i32 = arith.constant 0 : i32
    %c0_i32_0 = arith.constant 0 : i32
    %c0_i32_1 = arith.constant 0 : i32
    return %c0_i32, %c0_i32_0 : i32, i32
  }
  func.func @transform_7(%arg0: i32) -> (i32, i32) {
    %c0_i32 = arith.constant 0 : i32
    %c0_i32_0 = arith.constant 0 : i32
    %c0_i32_1 = arith.constant 0 : i32
    return %c0_i32, %c0_i32_0 : i32, i32
  }
  func.func @transform_8(%arg0: i32) -> (i32, i32) {
    %c0_i32 = arith.constant 0 : i32
    %c0_i32_0 = arith.constant 0 : i32
    %c0_i32_1 = arith.constant 0 : i32
    return %c0_i32, %c0_i32_0 : i32, i32
  }
  func.func @transform_9(%arg0: i32) -> (i32, i32) {
    %c0_i32 = arith.constant 0 : i32
    %c0_i32_0 = arith.constant 0 : i32
    %c0_i32_1 = arith.constant 0 : i32
    return %c0_i32, %c0_i32_0 : i32, i32
  }
  func.func @transform_10(%arg0: i32) -> (i32, i32) {
    %c0_i32 = arith.constant 0 : i32
    %c0_i32_0 = arith.constant 0 : i32
    %c0_i32_1 = arith.constant 0 : i32
    return %c0_i32, %c0_i32_0 : i32, i32
  }
  func.func @transform_11(%arg0: i32) -> (i32, i32) {
    %c0_i32 = arith.constant 0 : i32
    %c0_i32_0 = arith.constant 0 : i32
    %c0_i32_1 = arith.constant 0 : i32
    return %c0_i32, %c0_i32_0 : i32, i32
  }
  func.func @transform_12(%arg0: i32) -> (i32, i32) {
    %c0_i32 = arith.constant 0 : i32
    %c0_i32_0 = arith.constant 0 : i32
    return %c0_i32, %arg0 : i32, i32
  }
}

</mosaic_0001>

<llo_original>
// kernel: tpu_custom_call.1
$region0: #{tpu_custom_call.1}
  #allocation0 [shape = 'u32[]', space=smem, size = 0x4, offset = 0x4, fixed_abs, tag = 'smem constant byte address 0x4 - core index']
  #allocation1 [shape = 'u32[144,128]{1,0:T(1,128)}', space=vmem, size = 0x12000, scoped, tag = 'internal scratch']
  #allocation2 [shape = 'f32[1,1]{1,0:T(1,128)S(1)}', space=vmem, size = 0x200, scoped, tag = 'scoped memory for tpu_custom_call.1']
  %s0 = inlined_call_operand.vmem [shape: bf16[16,128], index: 0, kind: input, shape index: {}]
  %s1 = inlined_call_operand.vmem [shape: bf16[16,128], index: 1, kind: input, shape index: {}]
  %s2 = inlined_call_operand.vmem [shape: f32[32,8], index: 2, kind: input, shape index: {}]
  %s3 = inlined_call_operand.vmem [shape: f32[32,8], index: 3, kind: input, shape index: {}]
  %s4 = inlined_call_operand.vmem [shape: f32[32,1], index: 4, kind: input, shape index: {}]
  %s5 = inlined_call_operand.vmem [shape: f32[16,32], index: 5, kind: input, shape index: {}]
  %s6 = inlined_call_operand.vmem [shape: f32[16,1], index: 6, kind: input, shape index: {}]
  %s7 = inlined_call_operand.vmem [shape: f32[8,16], index: 7, kind: input, shape index: {}]
  %s8 = inlined_call_operand.vmem [shape: f32[8,1], index: 8, kind: input, shape index: {}]
  %s9 = inlined_call_operand.vmem [shape: f32[1,8], index: 9, kind: input, shape index: {}]
  %s10 = inlined_call_operand.vmem [shape: f32[1,8], index: 10, kind: input, shape index: {}]
  %s11 = inlined_call_operand.<no memory space> [shape: f32[1,1], index: 11, kind: input, shape index: {}]
  %s12 = inlined_call_operand.hbm [shape: f32[1,128], index: 12, kind: output, shape index: {}]
  %s13 = sld [smem:[#allocation0]]
  $region58: #{tpu_custom_call.1} parent=0
    _
  %s15 = ssub.s32 1, %s13
  %s16 = scalar_select 0, %s15, %s13
  %v17 = vstv %s11
  %18 = vst [vmem:[#allocation2] sm:$0x1] %v17
  $region1: #{tpu_custom_call.1} parent=0
    #allocation3 [shape = 'u8[512]{0}', space=vmem, size = 0x400, scoped, tag = 'output window, operand 0, single buffered']
    #allocation4 [shape = 's32[1]{0}', space=sflag, size = 0x4, scoped, tag = 'scoped memory for tpu_custom_call.1']
    %19 = vsyncpa [#allocation4], 0
    // Predicated region
    $region2: #{tpu_custom_call.1} parent=1 // pred_check
      _
    $region3: #{tpu_custom_call.1} parent=1 // pred_check_branch
      %21 = sbr.rel (0) target = $region5
    $region4: #{tpu_custom_call.1} parent=1 // pred_region
      _
    $region5: #{tpu_custom_call.1} parent=1 // pred_fallthru
      _
    // Predicated region
    $region6: #{tpu_custom_call.1} parent=1 // pred_check
      _
    $region7: #{tpu_custom_call.1} parent=1 // pred_check_branch
      %23 = sbr.rel (0) target = $region9
    $region8: #{tpu_custom_call.1} parent=1 // pred_region
      _
    $region9: #{tpu_custom_call.1} parent=1 // pred_fallthru
      _
    // Predicated region
    $region10: #{tpu_custom_call.1} parent=1 // pred_check
      _
    $region11: #{tpu_custom_call.1} parent=1 // pred_check_branch
      %25 = sbr.rel (0) target = $region13
    $region12: #{tpu_custom_call.1} parent=1 // pred_region
      _
    $region13: #{tpu_custom_call.1} parent=1 // pred_fallthru
      _
    // Predicated region
    $region14: #{tpu_custom_call.1} parent=1 // pred_check
      _
    $region15: #{tpu_custom_call.1} parent=1 // pred_check_branch
      %27 = sbr.rel (0) target = $region17
    $region16: #{tpu_custom_call.1} parent=1 // pred_region
      _
    $region17: #{tpu_custom_call.1} parent=1 // pred_fallthru
      _
    // Predicated region
    $region18: #{tpu_custom_call.1} parent=1 // pred_check
      _
    $region19: #{tpu_custom_call.1} parent=1 // pred_check_branch
      %29 = sbr.rel (0) target = $region21
    $region20: #{tpu_custom_call.1} parent=1 // pred_region
      _
    $region21: #{tpu_custom_call.1} parent=1 // pred_fallthru
      _
    // Predicated region
    $region22: #{tpu_custom_call.1} parent=1 // pred_check
      _
    $region23: #{tpu_custom_call.1} parent=1 // pred_check_branch
      %31 = sbr.rel (0) target = $region25
    $region24: #{tpu_custom_call.1} parent=1 // pred_region
      _
    $region25: #{tpu_custom_call.1} parent=1 // pred_fallthru
      _
    // Predicated region
    $region26: #{tpu_custom_call.1} parent=1 // pred_check
      _
    $region27: #{tpu_custom_call.1} parent=1 // pred_check_branch
      %33 = sbr.rel (0) target = $region29
    $region28: #{tpu_custom_call.1} parent=1 // pred_region
      _
    $region29: #{tpu_custom_call.1} parent=1 // pred_fallthru
      _
    // Predicated region
    $region30: #{tpu_custom_call.1} parent=1 // pred_check
      _
    $region31: #{tpu_custom_call.1} parent=1 // pred_check_branch
      %35 = sbr.rel (0) target = $region33
    $region32: #{tpu_custom_call.1} parent=1 // pred_region
      _
    $region33: #{tpu_custom_call.1} parent=1 // pred_fallthru
      _
    // Predicated region
    $region34: #{tpu_custom_call.1} parent=1 // pred_check
      _
    $region35: #{tpu_custom_call.1} parent=1 // pred_check_branch
      %37 = sbr.rel (0) target = $region37
    $region36: #{tpu_custom_call.1} parent=1 // pred_region
      _
    $region37: #{tpu_custom_call.1} parent=1 // pred_fallthru
      _
    // Predicated region
    $region38: #{tpu_custom_call.1} parent=1 // pred_check
      _
    $region39: #{tpu_custom_call.1} parent=1 // pred_check_branch
      %39 = sbr.rel (0) target = $region41
    $region40: #{tpu_custom_call.1} parent=1 // pred_region
      _
    $region41: #{tpu_custom_call.1} parent=1 // pred_fallthru
      _
    // Predicated region
    $region42: #{tpu_custom_call.1} parent=1 // pred_check
      _
    $region43: #{tpu_custom_call.1} parent=1 // pred_check_branch
      %41 = sbr.rel (0) target = $region45
    $region44: #{tpu_custom_call.1} parent=1 // pred_region
      _
    $region45: #{tpu_custom_call.1} parent=1 // pred_fallthru
      _
    // Predicated region
    $region46: #{tpu_custom_call.1} parent=1 // pred_check
      _
    $region47: #{tpu_custom_call.1} parent=1 // pred_check_branch
      %43 = sbr.rel (0) target = $region49
    $region48: #{tpu_custom_call.1} parent=1 // pred_region
      _
    $region49: #{tpu_custom_call.1} parent=1 // pred_fallthru
      _
    %v44 = vld [vmem:[%s0] sm:$0xf]
    %v45 = vld [vmem:[%s0 + $0x4] sm:$0xf]
    %v46 = vunpack.c.l.bf16 %v44
    %v47 = vunpack.c.l.bf16 %v45
    %v48 = vld [vmem:[%s1] sm:$0xf]
    %v49 = vld [vmem:[%s1 + $0x4] sm:$0xf]
    %v50 = vunpack.c.l.bf16 %v48
    %v51 = vunpack.c.l.bf16 %v49
    %v52 = vld [vmem:[%s2] sm:$0xff]
    %v53 = vld [vmem:[%s2 + $0x8] sm:$0xff]
    %v54 = vld [vmem:[%s2 + $0x10] sm:$0xff]
    %v55 = vld [vmem:[%s2 + $0x18] sm:$0xff]
    %v56 = vld [vmem:[%s3] sm:$0xff]
    %v57 = vld [vmem:[%s3 + $0x8] sm:$0xff]
    %v58 = vld [vmem:[%s3 + $0x10] sm:$0xff]
    %v59 = vld [vmem:[%s3 + $0x18] sm:$0xff]
    %vm60 = vcmask 64512
    %v62 = vsel %vm60, %v56, 0
    %v65 = vsel %vm60, %v57, 0
    %v68 = vsel %vm60, %v58, 0
    %v71 = vsel %vm60, %v59, 0
    %73 = vmatprep.subr.mxu0 0.0
    %74 = vmatpush1.msra.mxu0 0.0
    %75 = vmatprep.subr.mxu0 0.0
    %76 = vmatpush1.msra.mxu0 0.0
    %77 = vmatprep.subr.mxu0 0.0
    %78 = vmatpush1.msra.mxu0 0.0
    %79 = vmatprep.subr.mxu0 0.0
    %80 = vmatpush1.msra.mxu0 0.0
    %81 = vmatprep.subr.mxu0 0.0
    %82 = vmatpush1.msra.mxu0 0.0
    %83 = vmatprep.subr.mxu0 0.0
    %84 = vmatpush1.msra.mxu0 0.0
    %85 = vmatprep.subr.mxu0 0.0
    %86 = vmatpush1.msra.mxu0 0.0
    %87 = vmatprep.subr.mxu0 0.0
    %88 = vmatpush1.msra.mxu0 0.0
    %89 = vmatprep.subr.mxu0 0.0
    %90 = vmatpush1.msra.mxu0 0.0
    %91 = vmatprep.subr.mxu0 0.0
    %92 = vmatpush1.msra.mxu0 0.0
    %93 = vmatprep.subr.mxu0 0.0
    %94 = vmatpush1.msra.mxu0 0.0
    %95 = vmatprep.subr.mxu0 0.0
    %96 = vmatpush1.msra.mxu0 0.0
    %97 = vmatprep.subr.mxu0 0.0
    %98 = vmatpush1.msra.mxu0 0.0
    %99 = vmatprep.subr.mxu0 0.0
    %100 = vmatpush1.msra.mxu0 0.0
    %101 = vmatprep.subr.mxu0 0.0
    %102 = vmatpush1.msra.mxu0 0.0
    %103 = vmatprep.subr.mxu0 0.0
    %104 = vmatpush1.msra.mxu0 %v50
    %105 = vmatprep.subr.mxu0 0.0
    %106 = vmatpush2.msra.mxu0 0.0
    %107 = vmatprep.subr.mxu0 0.0
    %108 = vmatpush2.msra.mxu0 0.0
    %109 = vmatprep.subr.mxu0 0.0
    %110 = vmatpush2.msra.mxu0 0.0
    %111 = vmatprep.subr.mxu0 0.0
    %112 = vmatpush2.msra.mxu0 0.0
    %113 = vmatprep.subr.mxu0 0.0
    %114 = vmatpush2.msra.mxu0 0.0
    %115 = vmatprep.subr.mxu0 0.0
    %116 = vmatpush2.msra.mxu0 0.0
    %117 = vmatprep.subr.mxu0 0.0
    %118 = vmatpush2.msra.mxu0 0.0
    %119 = vmatprep.subr.mxu0 0.0
    %120 = vmatpush2.msra.mxu0 0.0
    %121 = vmatprep.subr.mxu0 0.0
    %122 = vmatpush2.msra.mxu0 0.0
    %123 = vmatprep.subr.mxu0 0.0
    %124 = vmatpush2.msra.mxu0 0.0
    %125 = vmatprep.subr.mxu0 0.0
    %126 = vmatpush2.msra.mxu0 0.0
    %127 = vmatprep.subr.mxu0 0.0
    %128 = vmatpush2.msra.mxu0 0.0
    %129 = vmatprep.subr.mxu0 0.0
    %130 = vmatpush2.msra.mxu0 0.0
    %131 = vmatprep.subr.mxu0 0.0
    %132 = vmatpush2.msra.mxu0 0.0
    %133 = vmatprep.subr.mxu0 0.0
    %134 = vmatpush2.msra.mxu0 0.0
    %135 = vmatprep.subr.mxu0 0.0
    %136 = vmatpush2.msra.mxu0 0.0
    %137 = vmatprep.mubr.f32.mxu0 0.0
    %138 = vmatmul.mubr.f32.gmra.mxu0 %v62
    %v139 = vpop.f32.mrf.mxu0
    %v140 = vadd.f32 0.0, %v139
    %v141 = vpop.f32.mrf.mxu0
    %142 = vmatprep.mubr.f32.mxu0 0.0
    %143 = vmatmul.mubr.f32.gmra.mxu0 %v65
    %v144 = vpop.f32.mrf.mxu0
    %v145 = vadd.f32 0.0, %v144
    %v146 = vpop.f32.mrf.mxu0
    %147 = vmatprep.mubr.f32.mxu0 0.0
    %148 = vmatmul.mubr.f32.gmra.mxu0 %v68
    %v149 = vpop.f32.mrf.mxu0
    %v150 = vadd.f32 0.0, %v149
    %v151 = vpop.f32.mrf.mxu0
    %152 = vmatprep.mubr.f32.mxu0 0.0
    %153 = vmatmul.mubr.f32.gmra.mxu0 %v71
    %v154 = vpop.f32.mrf.mxu0
    %v155 = vadd.f32 0.0, %v154
    %v156 = vpop.f32.mrf.mxu0
    %157 = vdwg.mxu0
    %v159 = vsel %vm60, %v52, 0
    %v162 = vsel %vm60, %v53, 0
    %v165 = vsel %vm60, %v54, 0
    %v168 = vsel %vm60, %v55, 0
    %170 = vmatprep.subr.mxu0 0.0
    %171 = vmatpush1.msra.mxu0 0.0
    %172 = vmatprep.subr.mxu0 0.0
    %173 = vmatpush1.msra.mxu0 0.0
    %174 = vmatprep.subr.mxu0 0.0
    %175 = vmatpush1.msra.mxu0 0.0
    %176 = vmatprep.subr.mxu0 0.0
    %177 = vmatpush1.msra.mxu0 0.0
    %178 = vmatprep.subr.mxu0 0.0
    %179 = vmatpush1.msra.mxu0 0.0
    %180 = vmatprep.subr.mxu0 0.0
    %181 = vmatpush1.msra.mxu0 0.0
    %182 = vmatprep.subr.mxu0 0.0
    %183 = vmatpush1.msra.mxu0 0.0
    %184 = vmatprep.subr.mxu0 0.0
    %185 = vmatpush1.msra.mxu0 0.0
    %186 = vmatprep.subr.mxu0 0.0
    %187 = vmatpush1.msra.mxu0 0.0
    %188 = vmatprep.subr.mxu0 0.0
    %189 = vmatpush1.msra.mxu0 0.0
    %190 = vmatprep.subr.mxu0 0.0
    %191 = vmatpush1.msra.mxu0 0.0
    %192 = vmatprep.subr.mxu0 0.0
    %193 = vmatpush1.msra.mxu0 0.0
    %194 = vmatprep.subr.mxu0 0.0
    %195 = vmatpush1.msra.mxu0 0.0
    %196 = vmatprep.subr.mxu0 0.0
    %197 = vmatpush1.msra.mxu0 0.0
    %198 = vmatprep.subr.mxu0 0.0
    %199 = vmatpush1.msra.mxu0 0.0
    %200 = vmatprep.subr.mxu0 0.0
    %201 = vmatpush1.msra.mxu0 %v46
    %202 = vmatprep.subr.mxu0 0.0
    %203 = vmatpush2.msra.mxu0 0.0
    %204 = vmatprep.subr.mxu0 0.0
    %205 = vmatpush2.msra.mxu0 0.0
    %206 = vmatprep.subr.mxu0 0.0
    %207 = vmatpush2.msra.mxu0 0.0
    %208 = vmatprep.subr.mxu0 0.0
    %209 = vmatpush2.msra.mxu0 0.0
    %210 = vmatprep.subr.mxu0 0.0
    %211 = vmatpush2.msra.mxu0 0.0
    %212 = vmatprep.subr.mxu0 0.0
    %213 = vmatpush2.msra.mxu0 0.0
    %214 = vmatprep.subr.mxu0 0.0
    %215 = vmatpush2.msra.mxu0 0.0
    %216 = vmatprep.subr.mxu0 0.0
    %217 = vmatpush2.msra.mxu0 0.0
    %218 = vmatprep.subr.mxu0 0.0
    %219 = vmatpush2.msra.mxu0 0.0
    %220 = vmatprep.subr.mxu0 0.0
    %221 = vmatpush2.msra.mxu0 0.0
    %222 = vmatprep.subr.mxu0 0.0
    %223 = vmatpush2.msra.mxu0 0.0
    %224 = vmatprep.subr.mxu0 0.0
    %225 = vmatpush2.msra.mxu0 0.0
    %226 = vmatprep.subr.mxu0 0.0
    %227 = vmatpush2.msra.mxu0 0.0
    %228 = vmatprep.subr.mxu0 0.0
    %229 = vmatpush2.msra.mxu0 0.0
    %230 = vmatprep.subr.mxu0 0.0
    %231 = vmatpush2.msra.mxu0 0.0
    %232 = vmatprep.subr.mxu0 0.0
    %233 = vmatpush2.msra.mxu0 0.0
    %234 = vmatprep.mubr.f32.mxu0 0.0
    %235 = vmatmul.mubr.f32.gmra.mxu0 %v159
    %v236 = vpop.f32.mrf.mxu0
    %v237 = vadd.f32 %v140, %v236
    %v238 = vpop.f32.mrf.mxu0
    %239 = vmatprep.mubr.f32.mxu0 0.0
    %240 = vmatmul.mubr.f32.gmra.mxu0 %v162
    %v241 = vpop.f32.mrf.mxu0
    %v242 = vadd.f32 %v145, %v241
    %v243 = vpop.f32.mrf.mxu0
    %244 = vmatprep.mubr.f32.mxu0 0.0
    %245 = vmatmul.mubr.f32.gmra.mxu0 %v165
    %v246 = vpop.f32.mrf.mxu0
    %v247 = vadd.f32 %v150, %v246
    %v248 = vpop.f32.mrf.mxu0
    %249 = vmatprep.mubr.f32.mxu0 0.0
    %250 = vmatmul.mubr.f32.gmra.mxu0 %v168
    %v251 = vpop.f32.mrf.mxu0
    %v252 = vadd.f32 %v155, %v251
    %v253 = vpop.f32.mrf.mxu0
    %254 = vdwg.mxu0
    %v255 = vld [vmem:[%s4] sm:$0xff]
    %v256 = vld [vmem:[%s4 + $0x8] sm:$0xff]
    %v257 = vld [vmem:[%s4 + $0x10] sm:$0xff]
    %v258 = vld [vmem:[%s4 + $0x18] sm:$0xff]
    %260 = vset.pattern.permute.xlu0 0
    %261 = vperm.xlu0 %260, %v255
    %v262 = vpop.permute.xlu0 %261
    %265 = vset.pattern.permute.xlu0 0
    %266 = vperm.xlu0 %265, %v256
    %v267 = vpop.permute.xlu0 %266
    %270 = vset.pattern.permute.xlu0 0
    %271 = vperm.xlu0 %270, %v257
    %v272 = vpop.permute.xlu0 %271
    %275 = vset.pattern.permute.xlu0 0
    %276 = vperm.xlu0 %275, %v258
    %v277 = vpop.permute.xlu0 %276
    %v279 = vadd.f32 %v237, %v262
    %v280 = vadd.f32 %v242, %v267
    %v281 = vadd.f32 %v247, %v272
    %v282 = vadd.f32 %v252, %v277
    %v283 = vmax.f32 %v279, 0.0
    %v284 = vmax.f32 %v280, 0.0
    %v285 = vmax.f32 %v281, 0.0
    %v286 = vmax.f32 %v282, 0.0
    %v287 = vld [vmem:[%s5] sm:$0xff]
    %v288 = vld [vmem:[%s5 + $0x8] sm:$0xff]
    %v289 = vld [vmem:[%s6] sm:$0xff]
    %v290 = vld [vmem:[%s6 + $0x8] sm:$0xff]
    %292 = vset.pattern.permute.xlu0 0
    %293 = vperm.xlu0 %292, %v289
    %v294 = vpop.permute.xlu0 %293
    %297 = vset.pattern.permute.xlu0 0
    %298 = vperm.xlu0 %297, %v290
    %v299 = vpop.permute.xlu0 %298
    %vm301 = vcmask 261120
    %v303 = vsel %vm301, %v287, 0
    %v306 = vsel %vm301, %v288, 0
    %308 = vmatprep.subr.mxu0 0.0
    %309 = vmatpush1.msra.mxu0 0.0
    %310 = vmatprep.subr.mxu0 0.0
    %311 = vmatpush1.msra.mxu0 0.0
    %312 = vmatprep.subr.mxu0 0.0
    %313 = vmatpush1.msra.mxu0 0.0
    %314 = vmatprep.subr.mxu0 0.0
    %315 = vmatpush1.msra.mxu0 0.0
    %316 = vmatprep.subr.mxu0 0.0
    %317 = vmatpush1.msra.mxu0 0.0
    %318 = vmatprep.subr.mxu0 0.0
    %319 = vmatpush1.msra.mxu0 0.0
    %320 = vmatprep.subr.mxu0 0.0
    %321 = vmatpush1.msra.mxu0 0.0
    %322 = vmatprep.subr.mxu0 0.0
    %323 = vmatpush1.msra.mxu0 0.0
    %324 = vmatprep.subr.mxu0 0.0
    %325 = vmatpush1.msra.mxu0 0.0
    %326 = vmatprep.subr.mxu0 0.0
    %327 = vmatpush1.msra.mxu0 0.0
    %328 = vmatprep.subr.mxu0 0.0
    %329 = vmatpush1.msra.mxu0 0.0
    %330 = vmatprep.subr.mxu0 0.0
    %331 = vmatpush1.msra.mxu0 0.0
    %332 = vmatprep.subr.mxu0 0.0
    %333 = vmatpush1.msra.mxu0 %v286
    %334 = vmatprep.subr.mxu0 0.0
    %335 = vmatpush1.msra.mxu0 %v285
    %336 = vmatprep.subr.mxu0 0.0
    %337 = vmatpush1.msra.mxu0 %v284
    %338 = vmatprep.subr.mxu0 0.0
    %339 = vmatpush1.msra.mxu0 %v283
    %340 = vmatprep.subr.mxu0 0.0
    %341 = vmatpush2.msra.mxu0 0.0
    %342 = vmatprep.subr.mxu0 0.0
    %343 = vmatpush2.msra.mxu0 0.0
    %344 = vmatprep.subr.mxu0 0.0
    %345 = vmatpush2.msra.mxu0 0.0
    %346 = vmatprep.subr.mxu0 0.0
    %347 = vmatpush2.msra.mxu0 0.0
    %348 = vmatprep.subr.mxu0 0.0
    %349 = vmatpush2.msra.mxu0 0.0
    %350 = vmatprep.subr.mxu0 0.0
    %351 = vmatpush2.msra.mxu0 0.0
    %352 = vmatprep.subr.mxu0 0.0
    %353 = vmatpush2.msra.mxu0 0.0
    %354 = vmatprep.subr.mxu0 0.0
    %355 = vmatpush2.msra.mxu0 0.0
    %356 = vmatprep.subr.mxu0 0.0
    %357 = vmatpush2.msra.mxu0 0.0
    %358 = vmatprep.subr.mxu0 0.0
    %359 = vmatpush2.msra.mxu0 0.0
    %360 = vmatprep.subr.mxu0 0.0
    %361 = vmatpush2.msra.mxu0 0.0
    %362 = vmatprep.subr.mxu0 0.0
    %363 = vmatpush2.msra.mxu0 0.0
    %364 = vmatprep.subr.mxu0 0.0
    %365 = vmatpush2.msra.mxu0 0.0
    %366 = vmatprep.subr.mxu0 0.0
    %367 = vmatpush2.msra.mxu0 0.0
    %368 = vmatprep.subr.mxu0 0.0
    %369 = vmatpush2.msra.mxu0 0.0
    %370 = vmatprep.subr.mxu0 0.0
    %371 = vmatpush2.msra.mxu0 0.0
    %372 = vmatprep.mubr.f32.mxu0 0.0
    %373 = vmatmul.mubr.f32.gmra.mxu0 %v303
    %v374 = vpop.f32.mrf.mxu0
    %v375 = vadd.f32 %v294, %v374
    %v376 = vpop.f32.mrf.mxu0
    %377 = vmatprep.mubr.f32.mxu0 0.0
    %378 = vmatmul.mubr.f32.gmra.mxu0 %v306
    %v379 = vpop.f32.mrf.mxu0
    %v380 = vadd.f32 %v299, %v379
    %v381 = vpop.f32.mrf.mxu0
    %382 = vdwg.mxu0
    %v383 = vmax.f32 %v375, 0.0
    %v384 = vmax.f32 %v380, 0.0
    %v385 = vld [vmem:[%s7] sm:$0xff]
    %v386 = vld [vmem:[%s8] sm:$0xff]
    %388 = vset.pattern.permute.xlu0 0
    %389 = vperm.xlu0 %388, %v386
    %v390 = vpop.permute.xlu0 %389
    %vm392 = vcmask 130048
    %v394 = vsel %vm392, %v385, 0
    %396 = vmatprep.subr.mxu0 0.0
    %397 = vmatpush1.msra.mxu0 0.0
    %398 = vmatprep.subr.mxu0 0.0
    %399 = vmatpush1.msra.mxu0 0.0
    %400 = vmatprep.subr.mxu0 0.0
    %401 = vmatpush1.msra.mxu0 0.0
    %402 = vmatprep.subr.mxu0 0.0
    %403 = vmatpush1.msra.mxu0 0.0
    %404 = vmatprep.subr.mxu0 0.0
    %405 = vmatpush1.msra.mxu0 0.0
    %406 = vmatprep.subr.mxu0 0.0
    %407 = vmatpush1.msra.mxu0 0.0
    %408 = vmatprep.subr.mxu0 0.0
    %409 = vmatpush1.msra.mxu0 0.0
    %410 = vmatprep.subr.mxu0 0.0
    %411 = vmatpush1.msra.mxu0 0.0
    %412 = vmatprep.subr.mxu0 0.0
    %413 = vmatpush1.msra.mxu0 0.0
    %414 = vmatprep.subr.mxu0 0.0
    %415 = vmatpush1.msra.mxu0 0.0
    %416 = vmatprep.subr.mxu0 0.0
    %417 = vmatpush1.msra.mxu0 0.0
    %418 = vmatprep.subr.mxu0 0.0
    %419 = vmatpush1.msra.mxu0 0.0
    %420 = vmatprep.subr.mxu0 0.0
    %421 = vmatpush1.msra.mxu0 0.0
    %422 = vmatprep.subr.mxu0 0.0
    %423 = vmatpush1.msra.mxu0 0.0
    %424 = vmatprep.subr.mxu0 0.0
    %425 = vmatpush1.msra.mxu0 %v384
    %426 = vmatprep.subr.mxu0 0.0
    %427 = vmatpush1.msra.mxu0 %v383
    %428 = vmatprep.subr.mxu0 0.0
    %429 = vmatpush2.msra.mxu0 0.0
    %430 = vmatprep.subr.mxu0 0.0
    %431 = vmatpush2.msra.mxu0 0.0
    %432 = vmatprep.subr.mxu0 0.0
    %433 = vmatpush2.msra.mxu0 0.0
    %434 = vmatprep.subr.mxu0 0.0
    %435 = vmatpush2.msra.mxu0 0.0
    %436 = vmatprep.subr.mxu0 0.0
    %437 = vmatpush2.msra.mxu0 0.0
    %438 = vmatprep.subr.mxu0 0.0
    %439 = vmatpush2.msra.mxu0 0.0
    %440 = vmatprep.subr.mxu0 0.0
    %441 = vmatpush2.msra.mxu0 0.0
    %442 = vmatprep.subr.mxu0 0.0
    %443 = vmatpush2.msra.mxu0 0.0
    %444 = vmatprep.subr.mxu0 0.0
    %445 = vmatpush2.msra.mxu0 0.0
    %446 = vmatprep.subr.mxu0 0.0
    %447 = vmatpush2.msra.mxu0 0.0
    %448 = vmatprep.subr.mxu0 0.0
    %449 = vmatpush2.msra.mxu0 0.0
    %450 = vmatprep.subr.mxu0 0.0
    %451 = vmatpush2.msra.mxu0 0.0
    %452 = vmatprep.subr.mxu0 0.0
    %453 = vmatpush2.msra.mxu0 0.0
    %454 = vmatprep.subr.mxu0 0.0
    %455 = vmatpush2.msra.mxu0 0.0
    %456 = vmatprep.subr.mxu0 0.0
    %457 = vmatpush2.msra.mxu0 0.0
    %458 = vmatprep.subr.mxu0 0.0
    %459 = vmatpush2.msra.mxu0 0.0
    %460 = vmatprep.mubr.f32.mxu0 0.0
    %461 = vmatmul.mubr.f32.gmra.mxu0 %v394
    %v462 = vpop.f32.mrf.mxu0
    %v463 = vadd.f32 %v390, %v462
    %v464 = vpop.f32.mrf.mxu0
    %465 = vdwg.mxu0
    %v466 = vmax.f32 %v463, 0.0
    %v467 = vmul.f32 %v47, %v51
    %v468 = vld [vmem:[%s9] sm:$0x1]
    %v469 = vld [vmem:[%s10] sm:$0x1]
    %v471 = vsel %vm60, %v469, 0
    %473 = vmatprep.subr.mxu0 0.0
    %474 = vmatpush1.msra.mxu0 0.0
    %475 = vmatprep.subr.mxu0 0.0
    %476 = vmatpush1.msra.mxu0 0.0
    %477 = vmatprep.subr.mxu0 0.0
    %478 = vmatpush1.msra.mxu0 0.0
    %479 = vmatprep.subr.mxu0 0.0
    %480 = vmatpush1.msra.mxu0 0.0
    %481 = vmatprep.subr.mxu0 0.0
    %482 = vmatpush1.msra.mxu0 0.0
    %483 = vmatprep.subr.mxu0 0.0
    %484 = vmatpush1.msra.mxu0 0.0
    %485 = vmatprep.subr.mxu0 0.0
    %486 = vmatpush1.msra.mxu0 0.0
    %487 = vmatprep.subr.mxu0 0.0
    %488 = vmatpush1.msra.mxu0 0.0
    %489 = vmatprep.subr.mxu0 0.0
    %490 = vmatpush1.msra.mxu0 0.0
    %491 = vmatprep.subr.mxu0 0.0
    %492 = vmatpush1.msra.mxu0 0.0
    %493 = vmatprep.subr.mxu0 0.0
    %494 = vmatpush1.msra.mxu0 0.0
    %495 = vmatprep.subr.mxu0 0.0
    %496 = vmatpush1.msra.mxu0 0.0
    %497 = vmatprep.subr.mxu0 0.0
    %498 = vmatpush1.msra.mxu0 0.0
    %499 = vmatprep.subr.mxu0 0.0
    %500 = vmatpush1.msra.mxu0 0.0
    %501 = vmatprep.subr.mxu0 0.0
    %502 = vmatpush1.msra.mxu0 0.0
    %503 = vmatprep.subr.mxu0 0.0
    %504 = vmatpush1.msra.mxu0 %v467
    %505 = vmatprep.subr.mxu0 0.0
    %506 = vmatpush2.msra.mxu0 0.0
    %507 = vmatprep.subr.mxu0 0.0
    %508 = vmatpush2.msra.mxu0 0.0
    %509 = vmatprep.subr.mxu0 0.0
    %510 = vmatpush2.msra.mxu0 0.0
    %511 = vmatprep.subr.mxu0 0.0
    %512 = vmatpush2.msra.mxu0 0.0
    %513 = vmatprep.subr.mxu0 0.0
    %514 = vmatpush2.msra.mxu0 0.0
    %515 = vmatprep.subr.mxu0 0.0
    %516 = vmatpush2.msra.mxu0 0.0
    %517 = vmatprep.subr.mxu0 0.0
    %518 = vmatpush2.msra.mxu0 0.0
    %519 = vmatprep.subr.mxu0 0.0
    %520 = vmatpush2.msra.mxu0 0.0
    %521 = vmatprep.subr.mxu0 0.0
    %522 = vmatpush2.msra.mxu0 0.0
    %523 = vmatprep.subr.mxu0 0.0
    %524 = vmatpush2.msra.mxu0 0.0
    %525 = vmatprep.subr.mxu0 0.0
    %526 = vmatpush2.msra.mxu0 0.0
    %527 = vmatprep.subr.mxu0 0.0
    %528 = vmatpush2.msra.mxu0 0.0
    %529 = vmatprep.subr.mxu0 0.0
    %530 = vmatpush2.msra.mxu0 0.0
    %531 = vmatprep.subr.mxu0 0.0
    %532 = vmatpush2.msra.mxu0 0.0
    %533 = vmatprep.subr.mxu0 0.0
    %534 = vmatpush2.msra.mxu0 0.0
    %535 = vmatprep.subr.mxu0 0.0
    %536 = vmatpush2.msra.mxu0 0.0
    %537 = vmatprep.mubr.f32.mxu0 0.0
    %538 = vmatmul.mubr.f32.gmra.mxu0 %v471
    %v539 = vpop.f32.mrf.mxu0
    %v540 = vadd.f32 0.0, %v539
    %v541 = vpop.f32.mrf.mxu0
    %542 = vdwg.mxu0
    %v544 = vsel %vm60, %v468, 0
    %546 = vmatprep.subr.mxu0 0.0
    %547 = vmatpush1.msra.mxu0 0.0
    %548 = vmatprep.subr.mxu0 0.0
    %549 = vmatpush1.msra.mxu0 0.0
    %550 = vmatprep.subr.mxu0 0.0
    %551 = vmatpush1.msra.mxu0 0.0
    %552 = vmatprep.subr.mxu0 0.0
    %553 = vmatpush1.msra.mxu0 0.0
    %554 = vmatprep.subr.mxu0 0.0
    %555 = vmatpush1.msra.mxu0 0.0
    %556 = vmatprep.subr.mxu0 0.0
    %557 = vmatpush1.msra.mxu0 0.0
    %558 = vmatprep.subr.mxu0 0.0
    %559 = vmatpush1.msra.mxu0 0.0
    %560 = vmatprep.subr.mxu0 0.0
    %561 = vmatpush1.msra.mxu0 0.0
    %562 = vmatprep.subr.mxu0 0.0
    %563 = vmatpush1.msra.mxu0 0.0
    %564 = vmatprep.subr.mxu0 0.0
    %565 = vmatpush1.msra.mxu0 0.0
    %566 = vmatprep.subr.mxu0 0.0
    %567 = vmatpush1.msra.mxu0 0.0
    %568 = vmatprep.subr.mxu0 0.0
    %569 = vmatpush1.msra.mxu0 0.0
    %570 = vmatprep.subr.mxu0 0.0
    %571 = vmatpush1.msra.mxu0 0.0
    %572 = vmatprep.subr.mxu0 0.0
    %573 = vmatpush1.msra.mxu0 0.0
    %574 = vmatprep.subr.mxu0 0.0
    %575 = vmatpush1.msra.mxu0 0.0
    %576 = vmatprep.subr.mxu0 0.0
    %577 = vmatpush1.msra.mxu0 %v466
    %578 = vmatprep.subr.mxu0 0.0
    %579 = vmatpush2.msra.mxu0 0.0
    %580 = vmatprep.subr.mxu0 0.0
    %581 = vmatpush2.msra.mxu0 0.0
    %582 = vmatprep.subr.mxu0 0.0
    %583 = vmatpush2.msra.mxu0 0.0
    %584 = vmatprep.subr.mxu0 0.0
    %585 = vmatpush2.msra.mxu0 0.0
    %586 = vmatprep.subr.mxu0 0.0
    %587 = vmatpush2.msra.mxu0 0.0
    %588 = vmatprep.subr.mxu0 0.0
    %589 = vmatpush2.msra.mxu0 0.0
    %590 = vmatprep.subr.mxu0 0.0
    %591 = vmatpush2.msra.mxu0 0.0
    %592 = vmatprep.subr.mxu0 0.0
    %593 = vmatpush2.msra.mxu0 0.0
    %594 = vmatprep.subr.mxu0 0.0
    %595 = vmatpush2.msra.mxu0 0.0
    %596 = vmatprep.subr.mxu0 0.0
    %597 = vmatpush2.msra.mxu0 0.0
    %598 = vmatprep.subr.mxu0 0.0
    %599 = vmatpush2.msra.mxu0 0.0
    %600 = vmatprep.subr.mxu0 0.0
    %601 = vmatpush2.msra.mxu0 0.0
    %602 = vmatprep.subr.mxu0 0.0
    %603 = vmatpush2.msra.mxu0 0.0
    %604 = vmatprep.subr.mxu0 0.0
    %605 = vmatpush2.msra.mxu0 0.0
    %606 = vmatprep.subr.mxu0 0.0
    %607 = vmatpush2.msra.mxu0 0.0
    %608 = vmatprep.subr.mxu0 0.0
    %609 = vmatpush2.msra.mxu0 0.0
    %610 = vmatprep.mubr.f32.mxu0 0.0
    %611 = vmatmul.mubr.f32.gmra.mxu0 %v544
    %v612 = vpop.f32.mrf.mxu0
    %v613 = vadd.f32 %v540, %v612
    %v614 = vpop.f32.mrf.mxu0
    %615 = vdwg.mxu0
    %v616 = vld [vmem:[#allocation2] sm:$0x1]
    %618 = vset.pattern.permute.xlu0 0
    %619 = vperm.xlu0 %618, %v616
    %v620 = vpop.permute.xlu0 %619
    %v622 = vlaneseq
    %v623 = vshrl.u32 %v622, 7
    %v624 = vsub.s32 0, %v623
    %v625 = vrot.slane %v620, %v624
    %v626 = vadd.f32 %v613, %v625
    %627 = vst [vmem:[#allocation3] sm:$0x1] %v626
    // Predicated region
    $region50: #{tpu_custom_call.1} parent=1 // pred_check
      _
    $region51: #{tpu_custom_call.1} parent=1 // pred_check_branch
      %629 = sbr.rel (0) target = $region53
    $region52: #{tpu_custom_call.1} parent=1 // pred_region
      %s631 = ssub.s32 16, 16
      %632 = vsyncadd [#allocation4], %s631
      %s634 = sshll.u32 [#allocation3], 4
      %s635 = int_to_ptr.vmem [resolvable:$true] %s634
      %637 = dma.vmem_to_hbm [thread:$0]  %s635, 16, %s12, [#allocation4]
    $region53: #{tpu_custom_call.1} parent=1 // pred_fallthru
      _
    // Predicated region
    $region54: #{tpu_custom_call.1} parent=1 // pred_check
      _
    $region55: #{tpu_custom_call.1} parent=1 // pred_check_branch
      %639 = sbr.rel (0) target = $region57
    $region56: #{tpu_custom_call.1} parent=1 // pred_region
      %640 = dma.done [#allocation4], 16
    $region57: #{tpu_custom_call.1} parent=1 // pred_fallthru
      _
    %641 = vsyncpa [#allocation4], 1

</llo_original>
